<compile_context>
chip_gen: v5e
topology: v5e:2x2
jax: 0.10.0
libtpu: 0.0.40
codegen_flags: <defaults>
</compile_context>

<pallas_src>
import math

import numpy as np
import jax
import jax.numpy as jnp
from jax.experimental import pallas as pl
from jax.experimental.pallas import tpu as pltpu


def _num_frequencies_nyquist(samples: int) -> int:
    nyquist_rate = 1.0 / (2.0 * (2.0 * 1.0 / samples))
    return int(math.floor(math.log(nyquist_rate, 2)))


def _round_up(x: int, m: int) -> int:
    return ((x + m - 1) // m) * m


def _pe_kernel(w_ref, b_ref, linw_ref, sinw_ref, coords_ref, out_ref):
    # coords tile: (tm, P*F); W: (P*F, P*E) block-diagonal; b/linw/sinw: (1, P*E)
    coords = coords_ref[...].astype(jnp.float32)
    # Phase matmul on the MXU (vector-extended slot, idle otherwise); bias adds
    # the pi/2 offsets so cos(x) = sin(x + pi/2).  Kept in f32 throughout.
    phases = jnp.dot(coords, w_ref[...],
                     preferred_element_type=jnp.float32,
                     precision=jax.lax.Precision.HIGHEST)
    phases = phases + b_ref[...]
    # Select-free combine: linw = 1.0 on pass-through (identity) columns,
    # sinw = 1 - linw on sin/cos columns.  No iota / compare / vsel per step.
    out = phases * linw_ref[...] + jnp.sin(phases) * sinw_ref[...]
    out_ref[...] = out.astype(out_ref.dtype)   # one lane-dense full-tile store


class PositionalEncoderPallas:
    """JAX/Pallas equivalent of the PyTorch PositionalEncoder forward pass."""

    def __init__(self, in_features, sidelength=None, use_nyquist=True,
                 num_frequencies=None, scale=1.4):
        self.in_features = in_features
        self.scale = scale
        if num_frequencies is None:
            if in_features == 3:
                self.num_frequencies = 10
            elif in_features == 2:
                assert sidelength is not None
                if isinstance(sidelength, int):
                    sidelength = (sidelength, sidelength)
                self.num_frequencies = 4
                if use_nyquist:
                    self.num_frequencies = _num_frequencies_nyquist(
                        min(sidelength[0], sidelength[1]))
            else:
                raise ValueError("num_frequencies must be given for this in_features")
        else:
            self.num_frequencies = num_frequencies
        self.out_dim = in_features + in_features * 2 * self.num_frequencies

        # Base (per logical row) fused-encoding tables: phases = coords @ W + B.
        # Column order matches the PyTorch module:
        #   [c_0..c_{F-1}, sin(f0*c0), cos(f0*c0), sin(f0*c1), cos(f0*c1), ...]
        F, E = in_features, self.out_dim
        w = np.zeros((F, E), np.float32)
        b = np.zeros((E,), np.float32)
        lin = np.zeros((E,), np.float32)
        for j in range(F):
            w[j, j] = 1.0                       # identity (pass-through) block
            lin[j] = 1.0
        for i in range(self.num_frequencies):
            freq = (self.scale ** i) * math.pi
            for j in range(F):
                base = F + 2 * (i * F + j)
                w[j, base] = freq               # sin column
                w[j, base + 1] = freq           # cos column
                b[base + 1] = math.pi / 2.0     # cos(x) = sin(x + pi/2)
        self._w_base, self._b_base, self._lin_base = w, b, lin
        self._packed = {}   # P -> (W, B, lin_w, sin_w) device constants
        # TODO(synk): PyTorch's data_ptr()-based coords_cache has no functional
        # JAX equivalent; the encoding is always recomputed here.

    # ---- row packing -------------------------------------------------------
    def _choose_pack(self, n: int, max_pack: int = 16) -> int:
        """Pick P so P*out_dim nearly fills 128-lane vreg multiples."""
        E = self.out_dim
        cands = []
        for p in range(1, max_pack + 1):
            lanes = p * E
            density = lanes / _round_up(lanes, 128)
            cands.append((p, density))
        best = max(d for _, d in cands)
        ok = [(p, d) for p, d in cands if d >= 0.98 * best]
        # Prefer a P that divides n (no padding / no output slice copy), then
        # higher density, then smaller P (less tail padding, smaller matmul K).
        ok.sort(key=lambda pd: (0 if n % pd[0] == 0 else 1, -pd[1], pd[0]))
        return ok[0][0]

    def _packed_tables(self, P: int):
        if P in self._packed:
            return self._packed[P]
        F, E = self.in_features, self.out_dim
        w = np.zeros((P * F, P * E), np.float32)       # block-diagonal
        b = np.zeros((1, P * E), np.float32)
        lin = np.zeros((1, P * E), np.float32)
        for p in range(P):
            w[p * F:(p + 1) * F, p * E:(p + 1) * E] = self._w_base
            b[0, p * E:(p + 1) * E] = self._b_base
            lin[0, p * E:(p + 1) * E] = self._lin_base
        tables = (jnp.asarray(w), jnp.asarray(b),
                  jnp.asarray(lin), jnp.asarray(1.0 - lin))
        self._packed[P] = tables
        return tables

    # ---- forward -----------------------------------------------------------
    def __call__(self, coords, *, tile_rows: int = 2048):
        F, E = self.in_features, self.out_dim
        assert coords.shape[-1] == F
        lead_shape = coords.shape[:-1]
        n = 1
        for d in lead_shape:
            n *= int(d)
        n = max(n, 1)
        flat = coords.reshape(n, F)

        P = self._choose_pack(n)
        w, b, linw, sinw = self._packed_tables(P)

        n_pad = _round_up(n, P)
        if n_pad != n:
            flat = jnp.pad(flat, ((0, n_pad - n), (0, 0)))
        n_rows = n_pad // P
        packed = flat.reshape(n_rows, P * F)            # metadata-only reshape

        # Row tile: multiple of 8 sublanes; force >= 2 grid steps when possible
        # so v7x megacore shards the 'parallel' axis across both TensorCores.
        # Ragged last block is masked by Pallas on write-back (no host padding).
        if n_rows <= 8:
            tm = n_rows
        else:
            tm = max(8, min(tile_rows, _round_up(pl.cdiv(n_rows, 2), 8)))
        grid = (pl.cdiv(n_rows, tm),)

        out_dtype = coords.dtype
        out_itemsize = np.dtype(out_dtype).itemsize
        cost = pl.CostEstimate(
            flops=2 * n_rows * (P * F) * (P * E) + 3 * n_pad * E,
            transcendentals=n_pad * E,
            bytes_accessed=(n_pad * F * np.dtype(flat.dtype).itemsize
                            + n_pad * E * out_itemsize
                            + (P * F * P * E + 3 * P * E) * 4),
        )

        out = pl.pallas_call(
            _pe_kernel,
            out_shape=jax.ShapeDtypeStruct((n_rows, P * E), out_dtype),
            grid_spec=pltpu.PrefetchScalarGridSpec(
                num_scalar_prefetch=0,
                grid=grid,
                in_specs=[
                    pl.BlockSpec((P * F, P * E), lambda i: (0, 0)),  # W (once)
                    pl.BlockSpec((1, P * E), lambda i: (0, 0)),      # B (once)
                    pl.BlockSpec((1, P * E), lambda i: (0, 0)),      # lin_w
                    pl.BlockSpec((1, P * E), lambda i: (0, 0)),      # sin_w
                    pl.BlockSpec((tm, P * F), lambda i: (i, 0)),     # coords tile
                ],
                out_specs=pl.BlockSpec((tm, P * E), lambda i: (i, 0)),
            ),
            compiler_params=pltpu.CompilerParams(
                dimension_semantics=("parallel",)),
            cost_estimate=cost,
        )(w, b, linw, sinw, packed)

        out = out.reshape(n_pad, E)
        if n_pad != n:
            out = out[:n]
        return out.reshape(*lead_shape, E)


def _reference(coords, in_features, num_frequencies, scale):
    parts = [coords]
    for i in range(num_frequencies):
        for j in range(in_features):
            c = coords[..., j]
            parts.append(jnp.sin((scale ** i) * math.pi * c)[..., None])
            parts.append(jnp.cos((scale ** i) * math.pi * c)[..., None])
    return jnp.concatenate(parts, axis=-1)


if __name__ == "__main__":
    key = jax.random.PRNGKey(0)
    k1, k2 = jax.random.split(key)
    batch, n_points = 2, 128

    # Case 1: in_features=2, sidelength=64 -> nyquist K=4, out_dim=18.
    # n=256 is not divisible by P=7 -> exercises the pad + ragged-block path.
    coords2 = jax.random.uniform(k1, (batch, n_points, 2), jnp.float32,
                                 minval=-1.0, maxval=1.0)
    enc2 = PositionalEncoderPallas(in_features=2, sidelength=64, use_nyquist=True)
    out2 = jax.block_until_ready(enc2(coords2))
    ref2 = _reference(coords2, 2, enc2.num_frequencies, enc2.scale)
    assert out2.shape == (batch, n_points, enc2.out_dim), out2.shape
    assert jnp.allclose(out2, ref2, atol=1e-4, rtol=1e-5), float(
        jnp.max(jnp.abs(out2 - ref2)))

    # Case 2: in_features=3 -> K=10, out_dim=63, P=2 (divides n exactly).
    coords3 = jax.random.uniform(k2, (batch, n_points, 3), jnp.float32,
                                 minval=-1.0, maxval=1.0)
    enc3 = PositionalEncoderPallas(in_features=3)
    out3 = jax.block_until_ready(enc3(coords3))
    ref3 = _reference(coords3, 3, enc3.num_frequencies, enc3.scale)
    assert out3.shape == (batch, n_points, enc3.out_dim), out3.shape
    assert jnp.allclose(out3, ref3, atol=1e-4, rtol=1e-5), float(
        jnp.max(jnp.abs(out3 - ref3)))

    print("KERNEL_OK")
</pallas_src>

<mosaic_0001>
module attributes {stable_mosaic.version = 11 : i64} {
  func.func @_pe_kernel(%arg0: i32, %arg1: memref<14x126xf32, #tpu.memory_space<vmem>>, %arg2: memref<1x126xf32, #tpu.memory_space<vmem>>, %arg3: memref<1x126xf32, #tpu.memory_space<vmem>>, %arg4: memref<1x126xf32, #tpu.memory_space<vmem>>, %arg5: memref<24x14xf32, #tpu.memory_space<vmem>>, %arg6: memref<24x126xf32, #tpu.memory_space<vmem>>) attributes {dimension_semantics = [#tpu.dimension_semantics<parallel>], iteration_bounds = array<i64: 2>, scalar_prefetch = 0 : i64, scratch_operands = 0 : i64, tpu.core_type = #tpu.core_type<tc>, window_params = [{pipeline_mode = #tpu.pipeline_mode<synchronous>, transform_indices = @transform_0, window_bounds = array<i64: 14, 126>}, {pipeline_mode = #tpu.pipeline_mode<synchronous>, transform_indices = @transform_1, window_bounds = array<i64: 1, 126>}, {pipeline_mode = #tpu.pipeline_mode<synchronous>, transform_indices = @transform_2, window_bounds = array<i64: 1, 126>}, {pipeline_mode = #tpu.pipeline_mode<synchronous>, transform_indices = @transform_3, window_bounds = array<i64: 1, 126>}, {transform_indices = @transform_4, window_bounds = array<i64: 24, 14>}, {transform_indices = @transform_5, window_bounds = array<i64: 24, 126>}]} {
    %c0 = arith.constant 0 : index
    %c0_0 = arith.constant 0 : index
    %0 = vector.load %arg5[%c0, %c0_0] : memref<24x14xf32, #tpu.memory_space<vmem>>, vector<24x14xf32>
    %c0_1 = arith.constant 0 : index
    %c0_2 = arith.constant 0 : index
    %1 = vector.load %arg1[%c0_1, %c0_2] : memref<14x126xf32, #tpu.memory_space<vmem>>, vector<14x126xf32>
    %cst = arith.constant dense<0.000000e+00> : vector<24x126xf32>
    %2 = tpu.matmul %0, %1, %cst {dimension_numbers = #tpu.dot_dimension_numbers<[1], [0], [0], [1], [0, 0, 1, 1], [], []>, precision = #tpu.contract_precision<fp32>} : vector<24x14xf32>, vector<14x126xf32>, vector<24x126xf32> -> vector<24x126xf32>
    %c0_3 = arith.constant 0 : index
    %c0_4 = arith.constant 0 : index
    %3 = vector.load %arg2[%c0_3, %c0_4] : memref<1x126xf32, #tpu.memory_space<vmem>>, vector<1x126xf32>
    %4 = vector.broadcast %3 : vector<1x126xf32> to vector<24x126xf32>
    %5 = arith.addf %2, %4 : vector<24x126xf32>
    %c0_5 = arith.constant 0 : index
    %c0_6 = arith.constant 0 : index
    %6 = vector.load %arg3[%c0_5, %c0_6] : memref<1x126xf32, #tpu.memory_space<vmem>>, vector<1x126xf32>
    %7 = vector.broadcast %6 : vector<1x126xf32> to vector<24x126xf32>
    %8 = arith.mulf %5, %7 : vector<24x126xf32>
    %9 = math.sin %5 : vector<24x126xf32>
    %c0_7 = arith.constant 0 : index
    %c0_8 = arith.constant 0 : index
    %10 = vector.load %arg4[%c0_7, %c0_8] : memref<1x126xf32, #tpu.memory_space<vmem>>, vector<1x126xf32>
    %11 = vector.broadcast %10 : vector<1x126xf32> to vector<24x126xf32>
    %12 = arith.mulf %9, %11 : vector<24x126xf32>
    %13 = arith.addf %8, %12 : vector<24x126xf32>
    %c0_9 = arith.constant 0 : index
    %c0_10 = arith.constant 0 : index
    %14 = vector.load %arg6[%c0_9, %c0_10] : memref<24x126xf32, #tpu.memory_space<vmem>>, vector<24x126xf32>
    tpu.vector_store %arg6[%c0_9, %c0_10], %13 {strides = array<i32>} : memref<24x126xf32, #tpu.memory_space<vmem>>, vector<24x126xf32>,
    return
  }
  func.func @transform_0(%arg0: i32) -> (i32, i32) {
    %c0_i32 = arith.constant 0 : i32
    %c0_i32_0 = arith.constant 0 : i32
    %c0_i32_1 = arith.constant 0 : i32
    return %c0_i32, %c0_i32_0 : i32, i32
  }
  func.func @transform_1(%arg0: i32) -> (i32, i32) {
    %c0_i32 = arith.constant 0 : i32
    %c0_i32_0 = arith.constant 0 : i32
    %c0_i32_1 = arith.constant 0 : i32
    return %c0_i32, %c0_i32_0 : i32, i32
  }
  func.func @transform_2(%arg0: i32) -> (i32, i32) {
    %c0_i32 = arith.constant 0 : i32
    %c0_i32_0 = arith.constant 0 : i32
    %c0_i32_1 = arith.constant 0 : i32
    return %c0_i32, %c0_i32_0 : i32, i32
  }
  func.func @transform_3(%arg0: i32) -> (i32, i32) {
    %c0_i32 = arith.constant 0 : i32
    %c0_i32_0 = arith.constant 0 : i32
    %c0_i32_1 = arith.constant 0 : i32
    return %c0_i32, %c0_i32_0 : i32, i32
  }
  func.func @transform_4(%arg0: i32) -> (i32, i32) {
    %c0_i32 = arith.constant 0 : i32
    %c0_i32_0 = arith.constant 0 : i32
    return %arg0, %c0_i32 : i32, i32
  }
  func.func @transform_5(%arg0: i32) -> (i32, i32) {
    %c0_i32 = arith.constant 0 : i32
    %c0_i32_0 = arith.constant 0 : i32
    return %arg0, %c0_i32 : i32, i32
  }
}

</mosaic_0001>

<llo_original>
// kernel: tpu_custom_call.1
$region0: #{tpu_custom_call.1}
  #allocation0 [shape = 'u32[]', space=smem, size = 0x4, offset = 0x4, fixed_abs, tag = 'smem constant byte address 0x4 - core index']
  #allocation1 [shape = 'u32[72,128]{1,0:T(1,128)}', space=vmem, size = 0x9000, scoped, tag = 'internal scratch']
  %s0 = inlined_call_operand.vmem [shape: f32[14,126], index: 0, kind: input, shape index: {}]
  %s1 = inlined_call_operand.vmem [shape: f32[1,126], index: 1, kind: input, shape index: {}]
  %s2 = inlined_call_operand.vmem [shape: f32[1,126], index: 2, kind: input, shape index: {}]
  %s3 = inlined_call_operand.vmem [shape: f32[1,126], index: 3, kind: input, shape index: {}]
  %s4 = inlined_call_operand.vmem [shape: f32[37,14], index: 4, kind: input, shape index: {}]
  %s5 = inlined_call_operand.hbm [shape: f32[37,126], index: 5, kind: output, shape index: {}]
  %s6 = sld [smem:[#allocation0]]
  $region53: #{tpu_custom_call.1} parent=0
    _
  %s8 = ssub.s32 1, %s6
  %s9 = scalar_select 0, %s8, %s6
  $region1: #{tpu_custom_call.1} parent=0
    #allocation2 [shape = 'u8[24576]{0}', space=vmem, size = 0x6000, scoped, tag = 'output window, operand 0']
    #allocation3 [shape = 's32[2]{0}', space=sflag, size = 0x8, scoped, tag = 'scoped memory for tpu_custom_call.1']
    %10 = vsyncpa [#allocation3], 0
    %s11 = scalar_lea.sflag [#allocation3], 1
    %12 = vsyncpa %s11, 0
    loop: start=0, step=1, limit=4
    $region2: #{tpu_custom_call.1} parent=1 // loop_pre_header
      _
    $region3: #{tpu_custom_call.1} parent=1 // loop_header
      %s14 = sphi 0, %s18
      %p15 = scmp.ge.s32.totalorder %s14, 4
      %s22 = sphi 0, %s22
      %s24 = sphi 0, %s22
      %s25 = sphi 0, %s24
      %s39 = sphi 0, %s25
      %s43 = sphi 0, %s43
      %s45 = sphi 0, %s43
      %s46 = sphi 0, %s45
      %s60 = sphi 0, %s46
      %s64 = sphi 0, %s64
      %s66 = sphi 0, %s64
      %s67 = sphi 0, %s66
      %s81 = sphi 0, %s67
      %s85 = sphi 0, %s85
      %s87 = sphi 0, %s85
      %s88 = sphi 0, %s87
      %s102 = sphi 0, %s88
      %s108 = sphi 0, %s110
      %s111 = sphi 0, %s108
      %s112 = sphi 0, %s111
      %s128 = sphi 0, %s112
      %s134 = sphi 0, %s136
      %s137 = sphi 0, %s134
      %s138 = sphi 0, %s137
      %s154 = sphi 0, %s138
    $region4: #{tpu_custom_call.1} parent=1 // loop_header_branch
      %17 = sbr.rel (%p15) target = $region8
    $region5: #{tpu_custom_call.1} parent=1 // loop_body
      %s19 = ssub.s32 %s14, 1
      %s20 = ssub.s32 %s14, 2
      %s21 = sadd.s32 %s14, 1
      %s23 = sadd.s32 %s22, 1
      %p26 = scmp.eq.s32.totalorder %s14, 1
      %p27 = scmp.ne.s32.totalorder %s22, %s24
      %p28 = scmp.eq.s32.totalorder %s14, 0
      %p29 = por %p27, %p28
      %p30 = scmp.ne.s32.totalorder %s22, %s24
      %p31 = scmp.eq.s32.totalorder %s19, 1
      %p32 = por %p30, %p31
      %p33 = scmp.ne.s32.totalorder %s24, %s25
      %p34 = scmp.eq.s32.totalorder %s19, 0
      %p35 = por %p33, %p34
      %p36 = scmp.ne.s32.totalorder %s24, %s25
      %p37 = scmp.eq.s32.totalorder %s20, 1
      %p38 = por %p36, %p37
      %p40 = scmp.ne.s32.totalorder %s25, %s39
      %p41 = scmp.eq.s32.totalorder %s20, 0
      %p42 = por %p40, %p41
      %s44 = sadd.s32 %s43, 1
      %p47 = scmp.eq.s32.totalorder %s14, 1
      %p48 = scmp.ne.s32.totalorder %s43, %s45
      %p49 = scmp.eq.s32.totalorder %s14, 0
      %p50 = por %p48, %p49
      %p51 = scmp.ne.s32.totalorder %s43, %s45
      %p52 = scmp.eq.s32.totalorder %s19, 1
      %p53 = por %p51, %p52
      %p54 = scmp.ne.s32.totalorder %s45, %s46
      %p55 = scmp.eq.s32.totalorder %s19, 0
      %p56 = por %p54, %p55
      %p57 = scmp.ne.s32.totalorder %s45, %s46
      %p58 = scmp.eq.s32.totalorder %s20, 1
      %p59 = por %p57, %p58
      %p61 = scmp.ne.s32.totalorder %s46, %s60
      %p62 = scmp.eq.s32.totalorder %s20, 0
      %p63 = por %p61, %p62
      %s65 = sadd.s32 %s64, 1
      %p68 = scmp.eq.s32.totalorder %s14, 1
      %p69 = scmp.ne.s32.totalorder %s64, %s66
      %p70 = scmp.eq.s32.totalorder %s14, 0
      %p71 = por %p69, %p70
      %p72 = scmp.ne.s32.totalorder %s64, %s66
      %p73 = scmp.eq.s32.totalorder %s19, 1
      %p74 = por %p72, %p73
      %p75 = scmp.ne.s32.totalorder %s66, %s67
      %p76 = scmp.eq.s32.totalorder %s19, 0
      %p77 = por %p75, %p76
      %p78 = scmp.ne.s32.totalorder %s66, %s67
      %p79 = scmp.eq.s32.totalorder %s20, 1
      %p80 = por %p78, %p79
      %p82 = scmp.ne.s32.totalorder %s67, %s81
      %p83 = scmp.eq.s32.totalorder %s20, 0
      %p84 = por %p82, %p83
      %s86 = sadd.s32 %s85, 1
      %p89 = scmp.eq.s32.totalorder %s14, 1
      %p90 = scmp.ne.s32.totalorder %s85, %s87
      %p91 = scmp.eq.s32.totalorder %s14, 0
      %p92 = por %p90, %p91
      %p93 = scmp.ne.s32.totalorder %s85, %s87
      %p94 = scmp.eq.s32.totalorder %s19, 1
      %p95 = por %p93, %p94
      %p96 = scmp.ne.s32.totalorder %s87, %s88
      %p97 = scmp.eq.s32.totalorder %s19, 0
      %p98 = por %p96, %p97
      %p99 = scmp.ne.s32.totalorder %s87, %s88
      %p100 = scmp.eq.s32.totalorder %s20, 1
      %p101 = por %p99, %p100
      %p103 = scmp.ne.s32.totalorder %s88, %s102
      %p104 = scmp.eq.s32.totalorder %s20, 0
      %p105 = por %p103, %p104
      %s106 = ssub.s32 %s14, %s21
      %p107 = scmp.eq.s32.totalorder %s106, 0
      %s109 = sadd.s32 %s108, 1
      %s110 = scalar_select %p107, %s108, %s109
      %p113 = pneg %p107
      %p114 = scmp.eq.s32.totalorder %s14, 1
      %p115 = por %p113, %p114
      %p116 = scmp.ne.s32.totalorder %s108, %s111
      %p117 = scmp.eq.s32.totalorder %s14, 0
      %p118 = por %p116, %p117
      %p119 = scmp.ne.s32.totalorder %s108, %s111
      %p120 = scmp.eq.s32.totalorder %s19, 1
      %p121 = por %p119, %p120
      %p122 = scmp.ne.s32.totalorder %s111, %s112
      %p123 = scmp.eq.s32.totalorder %s19, 0
      %p124 = por %p122, %p123
      %p125 = scmp.ne.s32.totalorder %s111, %s112
      %p126 = scmp.eq.s32.totalorder %s20, 1
      %p127 = por %p125, %p126
      %p129 = scmp.ne.s32.totalorder %s112, %s128
      %p130 = scmp.eq.s32.totalorder %s20, 0
      %p131 = por %p129, %p130
      %s132 = ssub.s32 %s14, %s21
      %p133 = scmp.eq.s32.totalorder %s132, 0
      %s135 = sadd.s32 %s134, 1
      %s136 = scalar_select %p133, %s134, %s135
      %p139 = pneg %p133
      %p140 = scmp.eq.s32.totalorder %s14, 1
      %p141 = por %p139, %p140
      %p142 = scmp.ne.s32.totalorder %s134, %s137
      %p143 = scmp.eq.s32.totalorder %s14, 0
      %p144 = por %p142, %p143
      %p145 = scmp.ne.s32.totalorder %s134, %s137
      %p146 = scmp.eq.s32.totalorder %s19, 1
      %p147 = por %p145, %p146
      %p148 = scmp.ne.s32.totalorder %s137, %s138
      %p149 = scmp.eq.s32.totalorder %s19, 0
      %p150 = por %p148, %p149
      %p151 = scmp.ne.s32.totalorder %s137, %s138
      %p152 = scmp.eq.s32.totalorder %s20, 1
      %p153 = por %p151, %p152
      %p155 = scmp.ne.s32.totalorder %s138, %s154
      %p156 = scmp.eq.s32.totalorder %s20, 0
      %p157 = por %p155, %p156
      %p158 = scmp.le.s32.totalorder 1, %s14
      %p159 = scmp.lt.s32.totalorder %s14, 3
      %p160 = pnand %p158, %p159
      %p161 = pneg %p160
      // Predicated region
      $region9: #{tpu_custom_call.1} parent=5 // pred_check
        _
      $region10: #{tpu_custom_call.1} parent=5 // pred_check_branch
        %163 = sbr.rel (%p160) target = $region12
      $region11: #{tpu_custom_call.1} parent=5 // pred_region
        %s164 = ssub.s32 %s14, 1
        // Predicated region
        $region13: #{tpu_custom_call.1} parent=11 // pred_check
          %p165 = pneg %p35
        $region14: #{tpu_custom_call.1} parent=11 // pred_check_branch
          %167 = sbr.rel (%p165) target = $region16
        $region15: #{tpu_custom_call.1} parent=11 // pred_region
          _
        $region16: #{tpu_custom_call.1} parent=11 // pred_fallthru
          _
        // Predicated region
        $region17: #{tpu_custom_call.1} parent=11 // pred_check
          %p168 = pneg %p56
        $region18: #{tpu_custom_call.1} parent=11 // pred_check_branch
          %170 = sbr.rel (%p168) target = $region20
        $region19: #{tpu_custom_call.1} parent=11 // pred_region
          _
        $region20: #{tpu_custom_call.1} parent=11 // pred_fallthru
          _
        // Predicated region
        $region21: #{tpu_custom_call.1} parent=11 // pred_check
          %p171 = pneg %p77
        $region22: #{tpu_custom_call.1} parent=11 // pred_check_branch
          %173 = sbr.rel (%p171) target = $region24
        $region23: #{tpu_custom_call.1} parent=11 // pred_region
          _
        $region24: #{tpu_custom_call.1} parent=11 // pred_fallthru
          _
        // Predicated region
        $region25: #{tpu_custom_call.1} parent=11 // pred_check
          %p174 = pneg %p98
        $region26: #{tpu_custom_call.1} parent=11 // pred_check_branch
          %176 = sbr.rel (%p174) target = $region28
        $region27: #{tpu_custom_call.1} parent=11 // pred_region
          _
        $region28: #{tpu_custom_call.1} parent=11 // pred_fallthru
          _
      $region12: #{tpu_custom_call.1} parent=5 // pred_fallthru
        _
      %p177 = scmp.lt.s32.totalorder %s14, 2
      // Predicated region
      $region29: #{tpu_custom_call.1} parent=5 // pred_check
        %p178 = pneg %p177
      $region30: #{tpu_custom_call.1} parent=5 // pred_check_branch
        %180 = sbr.rel (%p178) target = $region32
      $region31: #{tpu_custom_call.1} parent=5 // pred_region
        // Predicated region
        $region33: #{tpu_custom_call.1} parent=31 // pred_check
          %p181 = pneg %p118
        $region34: #{tpu_custom_call.1} parent=31 // pred_check_branch
          %183 = sbr.rel (%p181) target = $region36
        $region35: #{tpu_custom_call.1} parent=31 // pred_region
          %s184 = smul.u32 3, %s14
          %s185 = ssub.s32 5, %s184
          %p186 = scmp.lt.s32.totalorder %s185, 3
          %s187 = scalar_select %p186, %s185, 3
          %s188 = smul.u32 8, %s187
          %p189 = scmp.lt.s32.totalorder %s184, 4
          %s190 = scalar_select %p189, %s184, 4
          %s191 = smul.addr %s190, 8
          %s192 = scalar_lea.vmem %s4, %s191
          %s193 = smul.u32 3, %s14
          %s194 = ssub.s32 5, %s193
          %p195 = scmp.lt.s32.totalorder %s194, 3
          %s196 = scalar_select %p195, %s194, 3
          %s197 = smul.u32 8, %s196
        $region36: #{tpu_custom_call.1} parent=31 // pred_fallthru
          _
      $region32: #{tpu_custom_call.1} parent=5 // pred_fallthru
        _
      %p198 = scmp.le.s32.totalorder 1, %s14
      %p199 = scmp.lt.s32.totalorder %s14, 3
      %p200 = pnand %p198, %p199
      %p201 = pneg %p200
      // Predicated region
      $region37: #{tpu_custom_call.1} parent=5 // pred_check
        _
      $region38: #{tpu_custom_call.1} parent=5 // pred_check_branch
        %203 = sbr.rel (%p200) target = $region40
      $region39: #{tpu_custom_call.1} parent=5 // pred_region
        %s204 = ssub.s32 %s14, 1
        %p205 = pneg %p35
        %p206 = pneg %p32
        %p207 = pneg %p56
        %p208 = pneg %p53
        %p209 = pneg %p77
        %p210 = pneg %p74
        %p211 = pneg %p98
        %p212 = pneg %p95
        %s213 = smul.u32 3, %s19
        %s214 = ssub.s32 5, %s213
        %p215 = scmp.lt.s32.totalorder %s214, 3
        %s216 = scalar_select %p215, %s214, 3
        %s217 = smul.u32 8, %s216
        %p218 = scmp.lt.s32.totalorder %s213, 4
        %s219 = scalar_select %p218, %s213, 4
        %s220 = smul.addr %s219, 8
        %s221 = scalar_lea.vmem %s4, %s220
        %p222 = pneg %p124
        %p223 = pneg %p121
        %p224 = pneg %p150
        %p225 = pneg %p147
        %s226 = sand.u32 %s137, 1
        %s227 = scalar_lea.sflag [#allocation3], %s226
        %s228 = sand.u32 %s137, 1
        %s229 = smul.addr %s228, 24
        %s230 = scalar_lea.vmem [#allocation2], %s229
        %s231 = smul.u32 3, %s19
        %s232 = ssub.s32 5, %s231
        %p233 = scmp.lt.s32.totalorder %s232, 3
        %s234 = scalar_select %p233, %s232, 3
        %s235 = smul.u32 8, %s234
        %p236 = scmp.lt.s32.totalorder %s231, 4
        %s237 = scalar_select %p236, %s231, 4
        %s238 = smul.addr %s237, 8
        %s239 = scalar_lea.vmem %s4, %s238
        %s240 = smul.u32 3, %s19
        %s241 = ssub.s32 5, %s240
        %p242 = scmp.lt.s32.totalorder %s241, 3
        %s243 = scalar_select %p242, %s241, 3
        %s244 = smul.u32 8, %s243
        %s245 = smul.u32 3, %s19
        %s246 = ssub.s32 5, %s245
        %p247 = scmp.lt.s32.totalorder %s246, 3
        %s248 = scalar_select %p247, %s246, 3
        %s249 = smul.u32 8, %s248
        %v250 = vld [vmem:[%s239] sm:$0xff]
        %v251 = vld [vmem:[%s239 + $0x8] sm:$0xff]
        %v252 = vld [vmem:[%s239 + $0x10] sm:$0xff]
        %v253 = vld [vmem:[%s0] sm:$0xff]
        %v254 = vld [vmem:[%s0 + $0x8] sm:$0x3f]
        %v255 = vld [vmem:[%s1] sm:$0x1]
        %v257 = vperm.slane %v255, 0
        %vm259 = vcmask 113664
        %v261 = vsel %vm259, %v250, 0
        %v264 = vsel %vm259, %v251, 0
        %v267 = vsel %vm259, %v252, 0
        %vm269 = vcmask 1045504
        %v271 = vsel %vm269, %v254, 0
        %273 = vmatpush.msra.mxu0 0.0
        %274 = vmatpush.msra.mxu0 0.0
        %275 = vmatpush.msra.mxu0 0.0
        %276 = vmatpush.msra.mxu0 0.0
        %277 = vmatpush.msra.mxu0 0.0
        %278 = vmatpush.msra.mxu0 0.0
        %279 = vmatpush.msra.mxu0 0.0
        %280 = vmatpush.msra.mxu0 0.0
        %281 = vmatpush.msra.mxu0 0.0
        %282 = vmatpush.msra.mxu0 0.0
        %283 = vmatpush.msra.mxu0 0.0
        %284 = vmatpush.msra.mxu0 0.0
        %285 = vmatpush.msra.mxu0 0.0
        %286 = vmatpush.msra.mxu0 0.0
        %v287 = vand.u32 %v271, 4294901760
        %288 = vmatpush.msra.mxu0 %v287
        %v289 = vand.u32 %v253, 4294901760
        %290 = vmatpush.msra.mxu0 %v289
        %v291 = vand.u32 %v261, 4294901760
        %v292 = vsub.f32 %v261, %v291
        %v293 = vand.u32 %v292, 4294901760
        %v294 = vsub.f32 %v292, %v293
        %v295 = vand.u32 %v294, 4294901760
        %296 = vmatmul.f32.gmra.mxu0 %v295
        %v297 = vpop.f32.mrf.mxu0
        %v298 = vadd.f32 %v257, %v297
        %v299 = vand.u32 %v264, 4294901760
        %v300 = vsub.f32 %v264, %v299
        %v301 = vand.u32 %v300, 4294901760
        %v302 = vsub.f32 %v300, %v301
        %v303 = vand.u32 %v302, 4294901760
        %304 = vmatmul.f32.gmra.mxu0 %v303
        %v305 = vpop.f32.mrf.mxu0
        %v306 = vadd.f32 %v257, %v305
        %v307 = vand.u32 %v267, 4294901760
        %v308 = vsub.f32 %v267, %v307
        %v309 = vand.u32 %v308, 4294901760
        %v310 = vsub.f32 %v308, %v309
        %v311 = vand.u32 %v310, 4294901760
        %312 = vmatmul.f32.gmra.mxu0 %v311
        %v313 = vpop.f32.mrf.mxu0
        %v314 = vadd.f32 %v257, %v313
        %315 = vdwg.mxu0
        %316 = vmatpush.msra.mxu0 0.0
        %317 = vmatpush.msra.mxu0 0.0
        %318 = vmatpush.msra.mxu0 0.0
        %319 = vmatpush.msra.mxu0 0.0
        %320 = vmatpush.msra.mxu0 0.0
        %321 = vmatpush.msra.mxu0 0.0
        %322 = vmatpush.msra.mxu0 0.0
        %323 = vmatpush.msra.mxu0 0.0
        %324 = vmatpush.msra.mxu0 0.0
        %325 = vmatpush.msra.mxu0 0.0
        %326 = vmatpush.msra.mxu0 0.0
        %327 = vmatpush.msra.mxu0 0.0
        %328 = vmatpush.msra.mxu0 0.0
        %329 = vmatpush.msra.mxu0 0.0
        %v330 = vand.u32 %v271, 4294901760
        %v331 = vsub.f32 %v271, %v330
        %v332 = vand.u32 %v331, 4294901760
        %v333 = vsub.f32 %v331, %v332
        %v334 = vand.u32 %v333, 4294901760
        %335 = vmatpush.msra.mxu0 %v334
        %v336 = vand.u32 %v253, 4294901760
        %v337 = vsub.f32 %v253, %v336
        %v338 = vand.u32 %v337, 4294901760
        %v339 = vsub.f32 %v337, %v338
        %v340 = vand.u32 %v339, 4294901760
        %341 = vmatpush.msra.mxu0 %v340
        %v342 = vand.u32 %v261, 4294901760
        %343 = vmatmul.f32.gmra.mxu0 %v342
        %v344 = vpop.f32.mrf.mxu0
        %v345 = vadd.f32 %v298, %v344
        %v346 = vand.u32 %v264, 4294901760
        %347 = vmatmul.f32.gmra.mxu0 %v346
        %v348 = vpop.f32.mrf.mxu0
        %v349 = vadd.f32 %v306, %v348
        %v350 = vand.u32 %v267, 4294901760
        %351 = vmatmul.f32.gmra.mxu0 %v350
        %v352 = vpop.f32.mrf.mxu0
        %v353 = vadd.f32 %v314, %v352
        %354 = vdwg.mxu0
        %355 = vmatpush.msra.mxu0 0.0
        %356 = vmatpush.msra.mxu0 0.0
        %357 = vmatpush.msra.mxu0 0.0
        %358 = vmatpush.msra.mxu0 0.0
        %359 = vmatpush.msra.mxu0 0.0
        %360 = vmatpush.msra.mxu0 0.0
        %361 = vmatpush.msra.mxu0 0.0
        %362 = vmatpush.msra.mxu0 0.0
        %363 = vmatpush.msra.mxu0 0.0
        %364 = vmatpush.msra.mxu0 0.0
        %365 = vmatpush.msra.mxu0 0.0
        %366 = vmatpush.msra.mxu0 0.0
        %367 = vmatpush.msra.mxu0 0.0
        %368 = vmatpush.msra.mxu0 0.0
        %v369 = vand.u32 %v271, 4294901760
        %v370 = vsub.f32 %v271, %v369
        %371 = vmatpush.msra.mxu0 %v370
        %v372 = vand.u32 %v253, 4294901760
        %v373 = vsub.f32 %v253, %v372
        %374 = vmatpush.msra.mxu0 %v373
        %v375 = vand.u32 %v261, 4294901760
        %v376 = vsub.f32 %v261, %v375
        %377 = vmatmul.f32.gmra.mxu0 %v376
        %v378 = vpop.f32.mrf.mxu0
        %v379 = vadd.f32 %v345, %v378
        %v380 = vand.u32 %v264, 4294901760
        %v381 = vsub.f32 %v264, %v380
        %382 = vmatmul.f32.gmra.mxu0 %v381
        %v383 = vpop.f32.mrf.mxu0
        %v384 = vadd.f32 %v349, %v383
        %v385 = vand.u32 %v267, 4294901760
        %v386 = vsub.f32 %v267, %v385
        %387 = vmatmul.f32.gmra.mxu0 %v386
        %v388 = vpop.f32.mrf.mxu0
        %v389 = vadd.f32 %v353, %v388
        %390 = vdwg.mxu0
        %391 = vmatpush.msra.mxu0 0.0
        %392 = vmatpush.msra.mxu0 0.0
        %393 = vmatpush.msra.mxu0 0.0
        %394 = vmatpush.msra.mxu0 0.0
        %395 = vmatpush.msra.mxu0 0.0
        %396 = vmatpush.msra.mxu0 0.0
        %397 = vmatpush.msra.mxu0 0.0
        %398 = vmatpush.msra.mxu0 0.0
        %399 = vmatpush.msra.mxu0 0.0
        %400 = vmatpush.msra.mxu0 0.0
        %401 = vmatpush.msra.mxu0 0.0
        %402 = vmatpush.msra.mxu0 0.0
        %403 = vmatpush.msra.mxu0 0.0
        %404 = vmatpush.msra.mxu0 0.0
        %v405 = vand.u32 %v271, 4294901760
        %406 = vmatpush.msra.mxu0 %v405
        %v407 = vand.u32 %v253, 4294901760
        %408 = vmatpush.msra.mxu0 %v407
        %v409 = vand.u32 %v261, 4294901760
        %v410 = vsub.f32 %v261, %v409
        %v411 = vand.u32 %v410, 4294901760
        %412 = vmatmul.f32.gmra.mxu0 %v411
        %v413 = vpop.f32.mrf.mxu0
        %v414 = vadd.f32 %v379, %v413
        %v415 = vand.u32 %v264, 4294901760
        %v416 = vsub.f32 %v264, %v415
        %v417 = vand.u32 %v416, 4294901760
        %418 = vmatmul.f32.gmra.mxu0 %v417
        %v419 = vpop.f32.mrf.mxu0
        %v420 = vadd.f32 %v384, %v419
        %v421 = vand.u32 %v267, 4294901760
        %v422 = vsub.f32 %v267, %v421
        %v423 = vand.u32 %v422, 4294901760
        %424 = vmatmul.f32.gmra.mxu0 %v423
        %v425 = vpop.f32.mrf.mxu0
        %v426 = vadd.f32 %v389, %v425
        %427 = vdwg.mxu0
        %428 = vmatpush.msra.mxu0 0.0
        %429 = vmatpush.msra.mxu0 0.0
        %430 = vmatpush.msra.mxu0 0.0
        %431 = vmatpush.msra.mxu0 0.0
        %432 = vmatpush.msra.mxu0 0.0
        %433 = vmatpush.msra.mxu0 0.0
        %434 = vmatpush.msra.mxu0 0.0
        %435 = vmatpush.msra.mxu0 0.0
        %436 = vmatpush.msra.mxu0 0.0
        %437 = vmatpush.msra.mxu0 0.0
        %438 = vmatpush.msra.mxu0 0.0
        %439 = vmatpush.msra.mxu0 0.0
        %440 = vmatpush.msra.mxu0 0.0
        %441 = vmatpush.msra.mxu0 0.0
        %v442 = vand.u32 %v271, 4294901760
        %v443 = vsub.f32 %v271, %v442
        %v444 = vand.u32 %v443, 4294901760
        %445 = vmatpush.msra.mxu0 %v444
        %v446 = vand.u32 %v253, 4294901760
        %v447 = vsub.f32 %v253, %v446
        %v448 = vand.u32 %v447, 4294901760
        %449 = vmatpush.msra.mxu0 %v448
        %v450 = vand.u32 %v261, 4294901760
        %451 = vmatmul.f32.gmra.mxu0 %v450
        %v452 = vpop.f32.mrf.mxu0
        %v453 = vadd.f32 %v414, %v452
        %v454 = vand.u32 %v264, 4294901760
        %455 = vmatmul.f32.gmra.mxu0 %v454
        %v456 = vpop.f32.mrf.mxu0
        %v457 = vadd.f32 %v420, %v456
        %v458 = vand.u32 %v267, 4294901760
        %459 = vmatmul.f32.gmra.mxu0 %v458
        %v460 = vpop.f32.mrf.mxu0
        %v461 = vadd.f32 %v426, %v460
        %462 = vdwg.mxu0
        %463 = vmatpush.msra.mxu0 0.0
        %464 = vmatpush.msra.mxu0 0.0
        %465 = vmatpush.msra.mxu0 0.0
        %466 = vmatpush.msra.mxu0 0.0
        %467 = vmatpush.msra.mxu0 0.0
        %468 = vmatpush.msra.mxu0 0.0
        %469 = vmatpush.msra.mxu0 0.0
        %470 = vmatpush.msra.mxu0 0.0
        %471 = vmatpush.msra.mxu0 0.0
        %472 = vmatpush.msra.mxu0 0.0
        %473 = vmatpush.msra.mxu0 0.0
        %474 = vmatpush.msra.mxu0 0.0
        %475 = vmatpush.msra.mxu0 0.0
        %476 = vmatpush.msra.mxu0 0.0
        %v477 = vand.u32 %v271, 4294901760
        %478 = vmatpush.msra.mxu0 %v477
        %v479 = vand.u32 %v253, 4294901760
        %480 = vmatpush.msra.mxu0 %v479
        %v481 = vand.u32 %v261, 4294901760
        %482 = vmatmul.f32.gmra.mxu0 %v481
        %v483 = vpop.f32.mrf.mxu0
        %v484 = vadd.f32 %v453, %v483
        %v485 = vand.u32 %v264, 4294901760
        %486 = vmatmul.f32.gmra.mxu0 %v485
        %v487 = vpop.f32.mrf.mxu0
        %v488 = vadd.f32 %v457, %v487
        %v489 = vand.u32 %v267, 4294901760
        %490 = vmatmul.f32.gmra.mxu0 %v489
        %v491 = vpop.f32.mrf.mxu0
        %v492 = vadd.f32 %v461, %v491
        %493 = vdwg.mxu0
        %v494 = vld [vmem:[%s2] sm:$0x1]
        %v496 = vperm.slane %v494, 0
        %v498 = vmul.f32 %v484, %v496
        %v499 = vmul.f32 %v488, %v496
        %v500 = vmul.f32 %v492, %v496
        %v501 = vand.u32 2147483647, %v484
        %vm502 = vcmp.le.f32.partialorder %v501, 0.7853982
        %vm503 = vcmp.lt.s32.totalorder %v484, 0
        %v504 = vand.u32 %v484, 2139095040
        %v505 = vshrl.u32 %v504, 23
        %v506 = vsub.s32 %v505, 127
        %v507 = vand.u32 2147483647, %v484
        %v508 = vand.u32 %v507, 8388607
        %v509 = vor.u32 %v508, 8388608
        %v510 = vsub.s32 0, %v509
        %v511 = vadd.s32 %v506, 1
        %vm512 = vcmp.gt.s32.totalorder %v511, 0
        %v513 = vsel %vm512, %v511, 0
        %v514 = vshrl.u32 %v513, 5
        %v515 = vand.u32 %v513, 31
        %v516 = vsub.s32 32, %v515
        %v517 = vshrl.u32 683565275, %v516
        %v518 = vshll.u32 683565275, %v515
        %v519 = vshrl.u32 2475754826, %v516
        %v520 = vor.u32 %v518, %v519
        %v521 = vshll.u32 2475754826, %v515
        %v522 = vshrl.u32 2131351028, %v516
        %v523 = vor.u32 %v521, %v522
        %v524 = vshll.u32 2131351028, %v515
        %v525 = vshrl.u32 2102212464, %v516
        %v526 = vor.u32 %v524, %v525
        %v527 = vshll.u32 2102212464, %v515
        %v528 = vshrl.u32 920167782, %v516
        %v529 = vor.u32 %v527, %v528
        %v530 = vshll.u32 920167782, %v515
        %v531 = vshrl.u32 1326507024, %v516
        %v532 = vor.u32 %v530, %v531
        %vm533 = vcmp.lt.s32.totalorder %v514, 1
        %vm534 = vcmp.lt.s32.totalorder %v514, 2
        %vm535 = vcmp.lt.s32.totalorder %v514, 3
        %vm536 = vcmp.lt.s32.totalorder %v514, 4
        %v537 = vsel %vm533, %v517, %v520
        %v538 = vsel %vm536, %v526, 2102212464
        %v539 = vsel %vm535, %v523, %v538
        %v540 = vsel %vm534, %v537, %v539
        %v541 = vsel %vm533, %v520, %v523
        %v542 = vsel %vm536, %v529, 920167782
        %v543 = vsel %vm535, %v526, %v542
        %v544 = vsel %vm534, %v541, %v543
        %v545 = vsel %vm533, %v523, %v526
        %v546 = vsel %vm536, %v532, 1326507024
        %v547 = vsel %vm535, %v529, %v546
        %v548 = vsel %vm534, %v545, %v547
        %v549 = vshll.u32 %v509, 8
        %v550 = vand.u32 %v549, 65535
        %v551 = vshrl.u32 %v549, 16
        %v552 = vand.u32 %v548, 65535
        %v553 = vshrl.u32 %v548, 16
        %v554 = vmul.u32 %v550, %v552
        %v555 = vmul.u32 %v550, %v553
        %v556 = vmul.u32 %v551, %v552
        %v557 = vmul.u32 %v551, %v553
        %v558 = vshll.u32 %v555, 16
        %v559 = vshrl.u32 %v555, 16
        %v560 = vshll.u32 %v556, 16
        %v561 = vshrl.u32 %v556, 16
        %vm562 = vc.u32 %v554, %v558
        %v563 = vsel %vm562, 1, 0
        %v564 = vadd.s32 %v554, %v558
        %v565 = vadd.s32 %v557, %v563
        %vm566 = vc.u32 %v564, %v560
        %v567 = vsel %vm566, 1, 0
        %v568 = vadd.s32 %v564, %v560
        %v569 = vadd.s32 %v565, %v567
        %v570 = vadd.s32 %v569, %v559
        %v571 = vadd.s32 %v570, %v561
        %v572 = vand.u32 %v549, 65535
        %v573 = vshrl.u32 %v549, 16
        %v574 = vand.u32 %v544, 65535
        %v575 = vshrl.u32 %v544, 16
        %v576 = vmul.u32 %v572, %v574
        %v577 = vmul.u32 %v572, %v575
        %v578 = vmul.u32 %v573, %v574
        %v579 = vmul.u32 %v573, %v575
        %v580 = vshll.u32 %v577, 16
        %v581 = vshrl.u32 %v577, 16
        %v582 = vshll.u32 %v578, 16
        %v583 = vshrl.u32 %v578, 16
        %vm584 = vc.u32 %v576, %v580
        %v585 = vsel %vm584, 1, 0
        %v586 = vadd.s32 %v576, %v580
        %v587 = vadd.s32 %v579, %v585
        %vm588 = vc.u32 %v586, %v582
        %v589 = vsel %vm588, 1, 0
        %v590 = vadd.s32 %v586, %v582
        %v591 = vadd.s32 %v587, %v589
        %v592 = vadd.s32 %v591, %v581
        %v593 = vadd.s32 %v592, %v583
        %v594 = vmul.u32 %v549, %v540
        %v595 = vadd.s32 %v571, %v590
        %vm596 = vc.u32 %v571, %v590
        %v597 = vadd.s32 %v593, 1
        %v598 = vsel %vm596, %v597, %v593
        %v599 = vadd.s32 %v594, %v598
        %v600 = vadd.s32 %v599, 536870912
        %v601 = vshrl.u32 %v600, 30
        %v602 = vshll.u32 %v601, 30
        %v603 = vsub.s32 %v599, %v602
        %vm604 = vcmp.lt.s32.totalorder %v603, 0
        %v605 = vsub.s32 0, %v603
        %v606 = vsel %vm604, %v605, %v603
        %v607 = vclz %v606
        %v608 = vsub.s32 %v607, 2
        %vm609 = vcmp.gt.s32.totalorder 0, %v608
        %v610 = vsel %vm609, 0, %v608
        %v611 = vsub.s32 32, %v610
        %v612 = vshll.u32 %v603, %v610
        %v613 = vshrl.u32 %v595, %v611
        %v614 = vor.u32 %v612, %v613
        %v615 = vsub.s32 4294967266, %v610
        %v616 = vadd.s32 %v615, 127
        %v617 = vshll.u32 %v616, 23
        %v618 = vor.u32 4788187, %v617
        %v619 = vand.u32 2147483647, %v618
        %v621 = vcvt.s32.f32 %v614
        %v622 = vmul.f32 %v621, %v619
        %v623 = vxor.u32 %v622, 2147483648
        %v624 = vsel %vm503, %v623, %v622
        %v625 = vsub.s32 4, %v601
        %v626 = vsel %vm503, %v625, %v601
        %v627 = vsel %vm502, %v484, %v624
        %v628 = vsel %vm502, 0, %v626
        %v629 = vmul.f32 %v627, %v627
        %v630 = vmul.f32 %v629, -0.001358992
        %v631 = vadd.f32 %v630, 0.041655596
        %v632 = vmul.f32 %v629, %v631
        %v633 = vadd.f32 %v632, -0.4999988
        %v634 = vmul.f32 %v629, %v633
        %v635 = vadd.f32 1.0, %v634
        %v636 = vmul.f32 %v627, %v627
        %v637 = vmul.f32 %v636, -0.00019511016
        %v638 = vadd.f32 %v637, 0.008332121
        %v639 = vmul.f32 %v636, %v638
        %v640 = vadd.f32 %v639, -0.16666654
        %v641 = vmul.f32 %v636, %v640
        %v642 = vadd.f32 %v641, 1.0
        %v643 = vmul.f32 %v642, %v627
        %vm644 = vweird.f32 %v484
        %v645 = vadd.s32 %v628, 3
        %v646 = vand.u32 %v645, 3
        %vm647 = vcmp.lt.s32.totalorder %v646, 2
        %vm648 = vcmp.eq.s32.totalorder %v646, 0
        %v649 = vxor.u32 %v643, 2147483648
        %v650 = vsel %vm648, %v635, %v649
        %vm651 = vcmp.eq.s32.totalorder %v646, 2
        %v652 = vxor.u32 %v635, 2147483648
        %v653 = vsel %vm651, %v652, %v643
        %v654 = vsel %vm647, %v650, %v653
        %v655 = vsel %vm644, nan, %v654
        %v656 = vand.u32 2147483647, %v488
        %vm657 = vcmp.le.f32.partialorder %v656, 0.7853982
        %vm658 = vcmp.lt.s32.totalorder %v488, 0
        %v659 = vand.u32 %v488, 2139095040
        %v660 = vshrl.u32 %v659, 23
        %v661 = vsub.s32 %v660, 127
        %v662 = vand.u32 2147483647, %v488
        %v663 = vand.u32 %v662, 8388607
        %v664 = vor.u32 %v663, 8388608
        %v665 = vsub.s32 0, %v664
        %v666 = vadd.s32 %v661, 1
        %vm667 = vcmp.gt.s32.totalorder %v666, 0
        %v668 = vsel %vm667, %v666, 0
        %v669 = vshrl.u32 %v668, 5
        %v670 = vand.u32 %v668, 31
        %v671 = vsub.s32 32, %v670
        %v672 = vshrl.u32 683565275, %v671
        %v673 = vshll.u32 683565275, %v670
        %v674 = vshrl.u32 2475754826, %v671
        %v675 = vor.u32 %v673, %v674
        %v676 = vshll.u32 2475754826, %v670
        %v677 = vshrl.u32 2131351028, %v671
        %v678 = vor.u32 %v676, %v677
        %v679 = vshll.u32 2131351028, %v670
        %v680 = vshrl.u32 2102212464, %v671
        %v681 = vor.u32 %v679, %v680
        %v682 = vshll.u32 2102212464, %v670
        %v683 = vshrl.u32 920167782, %v671
        %v684 = vor.u32 %v682, %v683
        %v685 = vshll.u32 920167782, %v670
        %v686 = vshrl.u32 1326507024, %v671
        %v687 = vor.u32 %v685, %v686
        %vm688 = vcmp.lt.s32.totalorder %v669, 1
        %vm689 = vcmp.lt.s32.totalorder %v669, 2
        %vm690 = vcmp.lt.s32.totalorder %v669, 3
        %vm691 = vcmp.lt.s32.totalorder %v669, 4
        %v692 = vsel %vm688, %v672, %v675
        %v693 = vsel %vm691, %v681, 2102212464
        %v694 = vsel %vm690, %v678, %v693
        %v695 = vsel %vm689, %v692, %v694
        %v696 = vsel %vm688, %v675, %v678
        %v697 = vsel %vm691, %v684, 920167782
        %v698 = vsel %vm690, %v681, %v697
        %v699 = vsel %vm689, %v696, %v698
        %v700 = vsel %vm688, %v678, %v681
        %v701 = vsel %vm691, %v687, 1326507024
        %v702 = vsel %vm690, %v684, %v701
        %v703 = vsel %vm689, %v700, %v702
        %v704 = vshll.u32 %v664, 8
        %v705 = vand.u32 %v704, 65535
        %v706 = vshrl.u32 %v704, 16
        %v707 = vand.u32 %v703, 65535
        %v708 = vshrl.u32 %v703, 16
        %v709 = vmul.u32 %v705, %v707
        %v710 = vmul.u32 %v705, %v708
        %v711 = vmul.u32 %v706, %v707
        %v712 = vmul.u32 %v706, %v708
        %v713 = vshll.u32 %v710, 16
        %v714 = vshrl.u32 %v710, 16
        %v715 = vshll.u32 %v711, 16
        %v716 = vshrl.u32 %v711, 16
        %vm717 = vc.u32 %v709, %v713
        %v718 = vsel %vm717, 1, 0
        %v719 = vadd.s32 %v709, %v713
        %v720 = vadd.s32 %v712, %v718
        %vm721 = vc.u32 %v719, %v715
        %v722 = vsel %vm721, 1, 0
        %v723 = vadd.s32 %v719, %v715
        %v724 = vadd.s32 %v720, %v722
        %v725 = vadd.s32 %v724, %v714
        %v726 = vadd.s32 %v725, %v716
        %v727 = vand.u32 %v704, 65535
        %v728 = vshrl.u32 %v704, 16
        %v729 = vand.u32 %v699, 65535
        %v730 = vshrl.u32 %v699, 16
        %v731 = vmul.u32 %v727, %v729
        %v732 = vmul.u32 %v727, %v730
        %v733 = vmul.u32 %v728, %v729
        %v734 = vmul.u32 %v728, %v730
        %v735 = vshll.u32 %v732, 16
        %v736 = vshrl.u32 %v732, 16
        %v737 = vshll.u32 %v733, 16
        %v738 = vshrl.u32 %v733, 16
        %vm739 = vc.u32 %v731, %v735
        %v740 = vsel %vm739, 1, 0
        %v741 = vadd.s32 %v731, %v735
        %v742 = vadd.s32 %v734, %v740
        %vm743 = vc.u32 %v741, %v737
        %v744 = vsel %vm743, 1, 0
        %v745 = vadd.s32 %v741, %v737
        %v746 = vadd.s32 %v742, %v744
        %v747 = vadd.s32 %v746, %v736
        %v748 = vadd.s32 %v747, %v738
        %v749 = vmul.u32 %v704, %v695
        %v750 = vadd.s32 %v726, %v745
        %vm751 = vc.u32 %v726, %v745
        %v752 = vadd.s32 %v748, 1
        %v753 = vsel %vm751, %v752, %v748
        %v754 = vadd.s32 %v749, %v753
        %v755 = vadd.s32 %v754, 536870912
        %v756 = vshrl.u32 %v755, 30
        %v757 = vshll.u32 %v756, 30
        %v758 = vsub.s32 %v754, %v757
        %vm759 = vcmp.lt.s32.totalorder %v758, 0
        %v760 = vsub.s32 0, %v758
        %v761 = vsel %vm759, %v760, %v758
        %v762 = vclz %v761
        %v763 = vsub.s32 %v762, 2
        %vm764 = vcmp.gt.s32.totalorder 0, %v763
        %v765 = vsel %vm764, 0, %v763
        %v766 = vsub.s32 32, %v765
        %v767 = vshll.u32 %v758, %v765
        %v768 = vshrl.u32 %v750, %v766
        %v769 = vor.u32 %v767, %v768
        %v770 = vsub.s32 4294967266, %v765
        %v771 = vadd.s32 %v770, 127
        %v772 = vshll.u32 %v771, 23
        %v773 = vor.u32 4788187, %v772
        %v774 = vand.u32 2147483647, %v773
        %v776 = vcvt.s32.f32 %v769
        %v777 = vmul.f32 %v776, %v774
        %v778 = vxor.u32 %v777, 2147483648
        %v779 = vsel %vm658, %v778, %v777
        %v780 = vsub.s32 4, %v756
        %v781 = vsel %vm658, %v780, %v756
        %v782 = vsel %vm657, %v488, %v779
        %v783 = vsel %vm657, 0, %v781
        %v784 = vmul.f32 %v782, %v782
        %v785 = vmul.f32 %v784, -0.001358992
        %v786 = vadd.f32 %v785, 0.041655596
        %v787 = vmul.f32 %v784, %v786
        %v788 = vadd.f32 %v787, -0.4999988
        %v789 = vmul.f32 %v784, %v788
        %v790 = vadd.f32 1.0, %v789
        %v791 = vmul.f32 %v782, %v782
        %v792 = vmul.f32 %v791, -0.00019511016
        %v793 = vadd.f32 %v792, 0.008332121
        %v794 = vmul.f32 %v791, %v793
        %v795 = vadd.f32 %v794, -0.16666654
        %v796 = vmul.f32 %v791, %v795
        %v797 = vadd.f32 %v796, 1.0
        %v798 = vmul.f32 %v797, %v782
        %vm799 = vweird.f32 %v488
        %v800 = vadd.s32 %v783, 3
        %v801 = vand.u32 %v800, 3
        %vm802 = vcmp.lt.s32.totalorder %v801, 2
        %vm803 = vcmp.eq.s32.totalorder %v801, 0
        %v804 = vxor.u32 %v798, 2147483648
        %v805 = vsel %vm803, %v790, %v804
        %vm806 = vcmp.eq.s32.totalorder %v801, 2
        %v807 = vxor.u32 %v790, 2147483648
        %v808 = vsel %vm806, %v807, %v798
        %v809 = vsel %vm802, %v805, %v808
        %v810 = vsel %vm799, nan, %v809
        %v811 = vand.u32 2147483647, %v492
        %vm812 = vcmp.le.f32.partialorder %v811, 0.7853982
        %vm813 = vcmp.lt.s32.totalorder %v492, 0
        %v814 = vand.u32 %v492, 2139095040
        %v815 = vshrl.u32 %v814, 23
        %v816 = vsub.s32 %v815, 127
        %v817 = vand.u32 2147483647, %v492
        %v818 = vand.u32 %v817, 8388607
        %v819 = vor.u32 %v818, 8388608
        %v820 = vsub.s32 0, %v819
        %v821 = vadd.s32 %v816, 1
        %vm822 = vcmp.gt.s32.totalorder %v821, 0
        %v823 = vsel %vm822, %v821, 0
        %v824 = vshrl.u32 %v823, 5
        %v825 = vand.u32 %v823, 31
        %v826 = vsub.s32 32, %v825
        %v827 = vshrl.u32 683565275, %v826
        %v828 = vshll.u32 683565275, %v825
        %v829 = vshrl.u32 2475754826, %v826
        %v830 = vor.u32 %v828, %v829
        %v831 = vshll.u32 2475754826, %v825
        %v832 = vshrl.u32 2131351028, %v826
        %v833 = vor.u32 %v831, %v832
        %v834 = vshll.u32 2131351028, %v825
        %v835 = vshrl.u32 2102212464, %v826
        %v836 = vor.u32 %v834, %v835
        %v837 = vshll.u32 2102212464, %v825
        %v838 = vshrl.u32 920167782, %v826
        %v839 = vor.u32 %v837, %v838
        %v840 = vshll.u32 920167782, %v825
        %v841 = vshrl.u32 1326507024, %v826
        %v842 = vor.u32 %v840, %v841
        %vm843 = vcmp.lt.s32.totalorder %v824, 1
        %vm844 = vcmp.lt.s32.totalorder %v824, 2
        %vm845 = vcmp.lt.s32.totalorder %v824, 3
        %vm846 = vcmp.lt.s32.totalorder %v824, 4
        %v847 = vsel %vm843, %v827, %v830
        %v848 = vsel %vm846, %v836, 2102212464
        %v849 = vsel %vm845, %v833, %v848
        %v850 = vsel %vm844, %v847, %v849
        %v851 = vsel %vm843, %v830, %v833
        %v852 = vsel %vm846, %v839, 920167782
        %v853 = vsel %vm845, %v836, %v852
        %v854 = vsel %vm844, %v851, %v853
        %v855 = vsel %vm843, %v833, %v836
        %v856 = vsel %vm846, %v842, 1326507024
        %v857 = vsel %vm845, %v839, %v856
        %v858 = vsel %vm844, %v855, %v857
        %v859 = vshll.u32 %v819, 8
        %v860 = vand.u32 %v859, 65535
        %v861 = vshrl.u32 %v859, 16
        %v862 = vand.u32 %v858, 65535
        %v863 = vshrl.u32 %v858, 16
        %v864 = vmul.u32 %v860, %v862
        %v865 = vmul.u32 %v860, %v863
        %v866 = vmul.u32 %v861, %v862
        %v867 = vmul.u32 %v861, %v863
        %v868 = vshll.u32 %v865, 16
        %v869 = vshrl.u32 %v865, 16
        %v870 = vshll.u32 %v866, 16
        %v871 = vshrl.u32 %v866, 16
        %vm872 = vc.u32 %v864, %v868
        %v873 = vsel %vm872, 1, 0
        %v874 = vadd.s32 %v864, %v868
        %v875 = vadd.s32 %v867, %v873
        %vm876 = vc.u32 %v874, %v870
        %v877 = vsel %vm876, 1, 0
        %v878 = vadd.s32 %v874, %v870
        %v879 = vadd.s32 %v875, %v877
        %v880 = vadd.s32 %v879, %v869
        %v881 = vadd.s32 %v880, %v871
        %v882 = vand.u32 %v859, 65535
        %v883 = vshrl.u32 %v859, 16
        %v884 = vand.u32 %v854, 65535
        %v885 = vshrl.u32 %v854, 16
        %v886 = vmul.u32 %v882, %v884
        %v887 = vmul.u32 %v882, %v885
        %v888 = vmul.u32 %v883, %v884
        %v889 = vmul.u32 %v883, %v885
        %v890 = vshll.u32 %v887, 16
        %v891 = vshrl.u32 %v887, 16
        %v892 = vshll.u32 %v888, 16
        %v893 = vshrl.u32 %v888, 16
        %vm894 = vc.u32 %v886, %v890
        %v895 = vsel %vm894, 1, 0
        %v896 = vadd.s32 %v886, %v890
        %v897 = vadd.s32 %v889, %v895
        %vm898 = vc.u32 %v896, %v892
        %v899 = vsel %vm898, 1, 0
        %v900 = vadd.s32 %v896, %v892
        %v901 = vadd.s32 %v897, %v899
        %v902 = vadd.s32 %v901, %v891
        %v903 = vadd.s32 %v902, %v893
        %v904 = vmul.u32 %v859, %v850
        %v905 = vadd.s32 %v881, %v900
        %vm906 = vc.u32 %v881, %v900
        %v907 = vadd.s32 %v903, 1
        %v908 = vsel %vm906, %v907, %v903
        %v909 = vadd.s32 %v904, %v908
        %v910 = vadd.s32 %v909, 536870912
        %v911 = vshrl.u32 %v910, 30
        %v912 = vshll.u32 %v911, 30
        %v913 = vsub.s32 %v909, %v912
        %vm914 = vcmp.lt.s32.totalorder %v913, 0
        %v915 = vsub.s32 0, %v913
        %v916 = vsel %vm914, %v915, %v913
        %v917 = vclz %v916
        %v918 = vsub.s32 %v917, 2
        %vm919 = vcmp.gt.s32.totalorder 0, %v918
        %v920 = vsel %vm919, 0, %v918
        %v921 = vsub.s32 32, %v920
        %v922 = vshll.u32 %v913, %v920
        %v923 = vshrl.u32 %v905, %v921
        %v924 = vor.u32 %v922, %v923
        %v925 = vsub.s32 4294967266, %v920
        %v926 = vadd.s32 %v925, 127
        %v927 = vshll.u32 %v926, 23
        %v928 = vor.u32 4788187, %v927
        %v929 = vand.u32 2147483647, %v928
        %v931 = vcvt.s32.f32 %v924
        %v932 = vmul.f32 %v931, %v929
        %v933 = vxor.u32 %v932, 2147483648
        %v934 = vsel %vm813, %v933, %v932
        %v935 = vsub.s32 4, %v911
        %v936 = vsel %vm813, %v935, %v911
        %v937 = vsel %vm812, %v492, %v934
        %v938 = vsel %vm812, 0, %v936
        %v939 = vmul.f32 %v937, %v937
        %v940 = vmul.f32 %v939, -0.001358992
        %v941 = vadd.f32 %v940, 0.041655596
        %v942 = vmul.f32 %v939, %v941
        %v943 = vadd.f32 %v942, -0.4999988
        %v944 = vmul.f32 %v939, %v943
        %v945 = vadd.f32 1.0, %v944
        %v946 = vmul.f32 %v937, %v937
        %v947 = vmul.f32 %v946, -0.00019511016
        %v948 = vadd.f32 %v947, 0.008332121
        %v949 = vmul.f32 %v946, %v948
        %v950 = vadd.f32 %v949, -0.16666654
        %v951 = vmul.f32 %v946, %v950
        %v952 = vadd.f32 %v951, 1.0
        %v953 = vmul.f32 %v952, %v937
        %vm954 = vweird.f32 %v492
        %v955 = vadd.s32 %v938, 3
        %v956 = vand.u32 %v955, 3
        %vm957 = vcmp.lt.s32.totalorder %v956, 2
        %vm958 = vcmp.eq.s32.totalorder %v956, 0
        %v959 = vxor.u32 %v953, 2147483648
        %v960 = vsel %vm958, %v945, %v959
        %vm961 = vcmp.eq.s32.totalorder %v956, 2
        %v962 = vxor.u32 %v945, 2147483648
        %v963 = vsel %vm961, %v962, %v953
        %v964 = vsel %vm957, %v960, %v963
        %v965 = vsel %vm954, nan, %v964
        %v966 = vld [vmem:[%s3] sm:$0x1]
        %v968 = vperm.slane %v966, 0
        %v970 = vmul.f32 %v655, %v968
        %v971 = vmul.f32 %v810, %v968
        %v972 = vmul.f32 %v965, %v968
        %v973 = vadd.f32 %v498, %v970
        %v974 = vadd.f32 %v499, %v971
        %v975 = vadd.f32 %v500, %v972
        %vm976 = vcmask 1031168
        %977 = vst.msk [vmem:[%s230] sm:$0xff] %vm976, %v973
        %978 = vst.msk [vmem:[%s230 + $0x8] sm:$0xff] %vm976, %v974
        %979 = vst.msk [vmem:[%s230 + $0x10] sm:$0xff] %vm976, %v975
        %s980 = sand.u32 %s137, 1
        %s981 = scalar_lea.sflag [#allocation3], %s980
        %s982 = sand.u32 %s137, 1
        %s983 = smul.addr %s982, 24
        %s984 = scalar_lea.vmem [#allocation2], %s983
        // Predicated region
        $region41: #{tpu_custom_call.1} parent=39 // pred_check
          %p985 = pneg %p147
        $region42: #{tpu_custom_call.1} parent=39 // pred_check_branch
          %987 = sbr.rel (%p985) target = $region44
        $region43: #{tpu_custom_call.1} parent=39 // pred_region
          %s988 = smul.u32 3, %s19
          %s989 = ssub.s32 5, %s988
          %p990 = scmp.lt.s32.totalorder %s989, 3
          %s991 = scalar_select %p990, %s989, 3
          %s992 = smul.u32 8, %s991
          %s993 = ssub.s32 24, %s992
          %s994 = sshll.u32 %s993, 4
          %995 = vsyncadd %s981, %s994
          %p996 = scmp.ne.s32.totalorder 0, %s992
          %s997 = smul.addr %s988, 8
          %s998 = scalar_lea.hbm %s5, %s997
          %s999 = smul.u32 8, %s991
          %s1000 = sshll.u32 %s984, 4
          %s1001 = int_to_ptr.vmem [resolvable:$true] %s1000
          %s1002 = sshll.u32 %s998, 4
          %s1003 = int_to_ptr.hbm [resolvable:$true] %s1002
          %s1004 = sshll.u32 %s999, 4
          %1008 = dma.vmem_to_hbm [thread:$0]  (%p996), %s1001, %s1004, %s1003, %s981, 128, 128, 8
        $region44: #{tpu_custom_call.1} parent=39 // pred_fallthru
          _
      $region40: #{tpu_custom_call.1} parent=5 // pred_fallthru
        _
      %p1009 = scmp.le.s32.totalorder 2, %s14
      // Predicated region
      $region45: #{tpu_custom_call.1} parent=5 // pred_check
        %p1010 = pneg %p1009
      $region46: #{tpu_custom_call.1} parent=5 // pred_check_branch
        %1012 = sbr.rel (%p1010) target = $region48
      $region47: #{tpu_custom_call.1} parent=5 // pred_region
        %s1013 = ssub.s32 %s14, 2
        // Predicated region
        $region49: #{tpu_custom_call.1} parent=47 // pred_check
          %p1014 = pneg %p153
        $region50: #{tpu_custom_call.1} parent=47 // pred_check_branch
          %1016 = sbr.rel (%p1014) target = $region52
        $region51: #{tpu_custom_call.1} parent=47 // pred_region
          %s1017 = sand.u32 %s138, 1
          %s1018 = scalar_lea.sflag [#allocation3], %s1017
          %s1019 = sand.u32 %s138, 1
          %s1020 = smul.addr %s1019, 24
          %s1021 = scalar_lea.vmem [#allocation2], %s1020
          %1023 = dma.done %s1018, 384
        $region52: #{tpu_custom_call.1} parent=47 // pred_fallthru
          _
      $region48: #{tpu_custom_call.1} parent=5 // pred_fallthru
        _
    $region6: #{tpu_custom_call.1} parent=1 // loop_footer
      %s18 = sadd.s32 1, %s14
    $region7: #{tpu_custom_call.1} parent=1 // loop_footer_branch
      %13 = sbr.rel target = $region3
    $region8: #{tpu_custom_call.1} parent=1 // loop_exit
      _
    %1024 = vsyncpa [#allocation3], 1
    %s1025 = scalar_lea.sflag [#allocation3], 1
    %1026 = vsyncpa %s1025, 1

</llo_original>
